<compile_context>
chip_gen: v6e
topology: v6e:2x2x1
jax: 0.10.0
libtpu: 0.0.40
codegen_flags: <defaults>
</compile_context>

<pallas_src>
import jax
import jax.numpy as jnp
from jax.experimental import pallas as pl
from jax.experimental.pallas import tpu as pltpu


def _sigmoid_kernel(x_ref, o_ref):
    # Compute in f32 (v5e VPU/EUP have no bf16); transcendental stays on the
    # EUP slot via jax.nn.sigmoid.  Cast only at the store.
    x = x_ref[...].astype(jnp.float32)
    o_ref[...] = jax.nn.sigmoid(x).astype(o_ref.dtype)


def sigmoid_pallas(x):
    """Elementwise sigmoid on an NCHW tensor via a lane-dense Pallas kernel."""
    orig_shape = x.shape
    dtype = x.dtype
    n = x.size

    LANES = 128
    SUBLANES = 8
    MAX_BLOCK_ROWS = 1024  # mem-bound sweet spot (512–2048) per v6e roofline data

    # Lane-dense 2D view: (rows, 128) with rows rounded up to a multiple of 8
    # (and, when gridded, to a multiple of block_rows) so every vreg store is
    # an unmasked vst.
    rows = pl.cdiv(n, LANES)
    rows_padded = ((rows + SUBLANES - 1) // SUBLANES) * SUBLANES

    if rows_padded <= MAX_BLOCK_ROWS:
        block_rows = rows_padded
    else:
        block_rows = MAX_BLOCK_ROWS
        rows_padded = ((rows_padded + block_rows - 1) // block_rows) * block_rows
    # TODO(synk): if this ever runs with huge activations on v7x, re-budget
    # block_rows against 64 MiB physical / 32 MiB scoped VMEM (or raise
    # vmem_limit_bytes explicitly); 1024 rows is already well within budget.

    n_padded = rows_padded * LANES
    x_flat = jnp.reshape(x, (-1,))
    if n_padded != n:
        x_flat = jnp.pad(x_flat, (0, n_padded - n))
    x2d = jnp.reshape(x_flat, (rows_padded, LANES))

    grid = (rows_padded // block_rows,)

    out2d = pl.pallas_call(
        _sigmoid_kernel,
        out_shape=jax.ShapeDtypeStruct((rows_padded, LANES), dtype),
        grid=grid,
        in_specs=[pl.BlockSpec((block_rows, LANES), lambda i: (i, 0))],
        out_specs=pl.BlockSpec((block_rows, LANES), lambda i: (i, 0)),
        compiler_params=pltpu.CompilerParams(
            dimension_semantics=("parallel",)),
    )(x2d)

    out_flat = jnp.reshape(out2d, (-1,))[:n]
    return jnp.reshape(out_flat, orig_shape)


if __name__ == "__main__":
    key = jax.random.PRNGKey(0)
    # Shape implied by the PyTorch module's forward: [1, 3840, 1, 1]
    x819 = jax.random.normal(key, (1, 3840, 1, 1), dtype=jnp.float32)

    # Reference (plain JAX).
    ref = jax.nn.sigmoid(x819)

    x820 = sigmoid_pallas(x819)
    jax.block_until_ready(x820)

    assert x820.shape == (1, 3840, 1, 1)
    assert x820.dtype == jnp.float32
    assert jnp.allclose(x820, ref, atol=1e-6, rtol=1e-6)

    print("KERNEL_OK")
</pallas_src>

<mosaic_0001>
module attributes {stable_mosaic.version = 11 : i64} {
  func.func @_sigmoid_kernel(%arg0: i32, %arg1: memref<32x128xf32, #tpu.memory_space<vmem>>, %arg2: memref<32x128xf32, #tpu.memory_space<vmem>>) attributes {dimension_semantics = [#tpu.dimension_semantics<parallel>], iteration_bounds = array<i64: 1>, scalar_prefetch = 0 : i64, scratch_operands = 0 : i64, tpu.core_type = #tpu.core_type<tc>, window_params = [{transform_indices = @transform_0, window_bounds = array<i64: 32, 128>}, {transform_indices = @transform_1, window_bounds = array<i64: 32, 128>}]} {
    %c0 = arith.constant 0 : index
    %c0_0 = arith.constant 0 : index
    %0 = vector.load %arg1[%c0, %c0_0] : memref<32x128xf32, #tpu.memory_space<vmem>>, vector<32x128xf32>
    %1 = arith.negf %0 : vector<32x128xf32>
    %2 = math.exp %1 : vector<32x128xf32>
    %cst = arith.constant 1.000000e+00 : f32
    %3 = vector.broadcast %cst : f32 to vector<32x128xf32>
    %4 = arith.addf %3, %2 : vector<32x128xf32>
    %5 = arith.divf %3, %4 : vector<32x128xf32>
    %c0_1 = arith.constant 0 : index
    %c0_2 = arith.constant 0 : index
    %6 = vector.load %arg2[%c0_1, %c0_2] : memref<32x128xf32, #tpu.memory_space<vmem>>, vector<32x128xf32>
    tpu.vector_store %arg2[%c0_1, %c0_2], %5 {strides = array<i32>} : memref<32x128xf32, #tpu.memory_space<vmem>>, vector<32x128xf32>,
    return
  }
  func.func @transform_0(%arg0: i32) -> (i32, i32) {
    %c0_i32 = arith.constant 0 : i32
    %c0_i32_0 = arith.constant 0 : i32
    return %arg0, %c0_i32 : i32, i32
  }
  func.func @transform_1(%arg0: i32) -> (i32, i32) {
    %c0_i32 = arith.constant 0 : i32
    %c0_i32_0 = arith.constant 0 : i32
    return %arg0, %c0_i32 : i32, i32
  }
}

</mosaic_0001>

<llo_original>
// kernel: tpu_custom_call.1
$region0: #{tpu_custom_call.1}
  #allocation0 [shape = 'u32[]', space=smem, size = 0x4, offset = 0x4, fixed_abs, tag = 'smem constant byte address 0x4 - core index']
  #allocation1 [shape = 'u32[144,128]{1,0:T(1,128)}', space=vmem, size = 0x12000, scoped, tag = 'internal scratch']
  %s0 = inlined_call_operand.hbm [shape: f32[32,128], index: 0, kind: input, shape index: {}]
  %s1 = inlined_call_operand.hbm [shape: f32[32,128], index: 1, kind: output, shape index: {}]
  %s2 = sld [smem:[#allocation0]]
  $region18: #{tpu_custom_call.1} parent=0
    _
  %s4 = ssub.s32 1, %s2
  %s5 = scalar_select 0, %s4, %s2
  $region1: #{tpu_custom_call.1} parent=0
    #allocation2 [shape = 'u8[16384]{0}', space=vmem, size = 0x4000, scoped, tag = 'input window, operand 0, single buffered']
    #allocation3 [shape = 's32[1]{0}', space=sflag, size = 0x4, scoped, tag = 'scoped memory for tpu_custom_call.1']
    #allocation4 [shape = 's32[1]{0}', space=sflag, size = 0x4, scoped, tag = 'scoped memory for tpu_custom_call.1']
    #allocation5 [shape = 'u8[16384]{0}', space=vmem, size = 0x4000, scoped, tag = 'output window, operand 0, single buffered']
    %6 = vsyncpa [#allocation3], 0
    %7 = vsyncpa [#allocation4], 0
    // Predicated region
    $region2: #{tpu_custom_call.1} parent=1 // pred_check
      _
    $region3: #{tpu_custom_call.1} parent=1 // pred_check_branch
      %9 = sbr.rel (0) target = $region5
    $region4: #{tpu_custom_call.1} parent=1 // pred_region
      %s11 = ssub.s32 512, 512
      %12 = vsyncadd [#allocation3], %s11
      %s13 = sshll.u32 [#allocation2], 4
      %s14 = int_to_ptr.vmem [resolvable:$true] %s13
      %19 = dma.hbm_to_vmem [thread:$0]  %s0, 512, %s14, [#allocation3], 128, 128, 8
    $region5: #{tpu_custom_call.1} parent=1 // pred_fallthru
      _
    // Predicated region
    $region6: #{tpu_custom_call.1} parent=1 // pred_check
      _
    $region7: #{tpu_custom_call.1} parent=1 // pred_check_branch
      %21 = sbr.rel (0) target = $region9
    $region8: #{tpu_custom_call.1} parent=1 // pred_region
      %22 = dma.done [#allocation3], 512
    $region9: #{tpu_custom_call.1} parent=1 // pred_fallthru
      _
    %v23 = vld [vmem:[#allocation2] sm:$0xff]
    %v24 = vld [vmem:[#allocation2 + $0x8] sm:$0xff]
    %v25 = vld [vmem:[#allocation2 + $0x10] sm:$0xff]
    %v26 = vld [vmem:[#allocation2 + $0x18] sm:$0xff]
    %v27 = vxor.u32 %v23, 2147483648
    %v28 = vxor.u32 %v24, 2147483648
    %v29 = vxor.u32 %v25, 2147483648
    %v30 = vxor.u32 %v26, 2147483648
    %v31 = vmul.f32 %v27, 1.442695
    %v32 = vpow.pop %v31
    %v33 = vmul.f32 %v28, 1.442695
    %v34 = vpow.pop %v33
    %v35 = vmul.f32 %v29, 1.442695
    %v36 = vpow.pop %v35
    %v37 = vmul.f32 %v30, 1.442695
    %v38 = vpow.pop %v37
    %v39 = vadd.f32 %v32, 1.0
    %v40 = vadd.f32 %v34, 1.0
    %v41 = vadd.f32 %v36, 1.0
    %v42 = vadd.f32 %v38, 1.0
    %v43 = vrcp.pop %v39
    %v44 = vmul.f32 1.0, %v43
    %v45 = vrcp.pop %v40
    %v46 = vmul.f32 1.0, %v45
    %v47 = vrcp.pop %v41
    %v48 = vmul.f32 1.0, %v47
    %v49 = vrcp.pop %v42
    %v50 = vmul.f32 1.0, %v49
    %51 = vst [vmem:[#allocation5] sm:$0xff] %v44
    %52 = vst [vmem:[#allocation5 + $0x8] sm:$0xff] %v46
    %53 = vst [vmem:[#allocation5 + $0x10] sm:$0xff] %v48
    %54 = vst [vmem:[#allocation5 + $0x18] sm:$0xff] %v50
    // Predicated region
    $region10: #{tpu_custom_call.1} parent=1 // pred_check
      _
    $region11: #{tpu_custom_call.1} parent=1 // pred_check_branch
      %56 = sbr.rel (0) target = $region13
    $region12: #{tpu_custom_call.1} parent=1 // pred_region
      %s58 = ssub.s32 512, 512
      %59 = vsyncadd [#allocation4], %s58
      %s60 = sshll.u32 [#allocation5], 4
      %s61 = int_to_ptr.vmem [resolvable:$true] %s60
      %66 = dma.vmem_to_hbm [thread:$0]  %s61, 512, %s1, [#allocation4], 128, 128, 8
    $region13: #{tpu_custom_call.1} parent=1 // pred_fallthru
      _
    // Predicated region
    $region14: #{tpu_custom_call.1} parent=1 // pred_check
      _
    $region15: #{tpu_custom_call.1} parent=1 // pred_check_branch
      %68 = sbr.rel (0) target = $region17
    $region16: #{tpu_custom_call.1} parent=1 // pred_region
      %69 = dma.done [#allocation4], 512
    $region17: #{tpu_custom_call.1} parent=1 // pred_fallthru
      _
    %70 = vsyncpa [#allocation3], 1
    %71 = vsyncpa [#allocation4], 1

</llo_original>
